<compile_context>
chip_gen: v7x
topology: tpu7x:2x2x1
jax: 0.10.0
libtpu: 0.0.40
codegen_flags: <defaults>
</compile_context>

<pallas_src>
import functools

import jax
import jax.numpy as jnp
from jax import lax
from jax.experimental import pallas as pl
from jax.experimental.pallas import tpu as pltpu

_LANES = 128


def _cdiv(a, b):
    return (a + b - 1) // b


def _round_up(x, m):
    return _cdiv(x, m) * m


def _chip_defaults():
    """(num_shards, tm_max, vmem_limit_bytes) tuned per TPU generation."""
    kind = ""
    try:
        kind = jax.devices()[0].device_kind.lower()
    except Exception:
        pass
    if "v7" in kind or "tpu7" in kind:
        # 2 TensorCores/chip -> shard the parallel axis; 64 MiB physical VMEM per TC.
        return 2, 8192, 40 << 20
    if "v6" in kind or "tpu6" in kind:
        # Single TC; plenty of VMEM headroom (128 MiB physical).
        return 1, 8192, 64 << 20
    # v5e / unknown: stay within the 16 MiB scoped-VMEM default.
    return 1, 4096, None


def _bce_kernel(pred_ref, tgt_ref, partial_ref, *, valid_rows, steps):
    # pred_ref / tgt_ref: (TM, 128) tiles in their native dtype.
    # partial_ref: (1, 8, 128) f32 resident output block -> per-shard lane accumulators.
    s = pl.program_id(0)   # shard (parallel axis; 2 TCs on v7x)
    i = pl.program_id(1)   # step within shard (reduction axis)

    @pl.when(i == 0)
    def _():
        partial_ref[...] = jnp.zeros_like(partial_ref)

    p = pred_ref[...].astype(jnp.float32)
    t = tgt_ref[...].astype(jnp.float32)
    tm, lanes = p.shape

    # PyTorch BCELoss clamps the log terms at -100 for numerical stability.
    log_p = jnp.maximum(jnp.log(p), -100.0)
    log_1mp = jnp.maximum(jnp.log(1.0 - p), -100.0)
    # contrib == t*log(p) + (1-t)*log(1-p)   (negated once in the wrapper)
    contrib = log_1mp + t * (log_p - log_1mp)

    row0 = (s * steps + i) * tm   # first (logical) row this grid step covers

    def accumulate(x):
        # (TM,128) -> (TM//8, 8, 128) is a tile-aligned (free) reshape; the reduce over
        # the leading dim is pure VALU adds into one vreg worth of accumulators.
        partial_ref[...] += jnp.sum(x.reshape(tm // 8, 8, lanes), axis=0)[None]

    @pl.when(row0 + tm <= valid_rows)          # interior tile: no mask work at all
    def _():
        accumulate(contrib)

    @pl.when(row0 + tm > valid_rows)           # boundary / out-of-range tile only
    def _():
        rows = row0 + lax.broadcasted_iota(jnp.int32, (tm, lanes), 0)
        accumulate(jnp.where(rows < valid_rows, contrib, 0.0))


def bce_loss(pred, target, *, num_shards=None, tm_max=None, vmem_limit_bytes=None):
    """Scalar mean BCE loss over all elements, matching nn.BCELoss(reduction='mean').

    pred: probabilities in [0,1] (any shape, float dtype).
    target: same shape, any numeric dtype (keep it narrow — it is cast to f32 in-kernel).
    """
    if pred.shape != target.shape:
        raise ValueError(f"shape mismatch: {pred.shape} vs {target.shape}")
    total = int(pred.size)

    d_shards, d_tm, d_vmem = _chip_defaults()
    num_shards = d_shards if num_shards is None else int(num_shards)
    tm_max = d_tm if tm_max is None else int(tm_max)
    vmem_limit_bytes = d_vmem if vmem_limit_bytes is None else vmem_limit_bytes

    pred_flat = pred.reshape(-1)
    tgt_flat = target.reshape(-1)

    rem = total % _LANES
    if rem:
        # Only lane-unaligned sizes pay a pad; pad values are loss-neutral
        # (p=1, t=1 -> contribution exactly 0), so no lane mask is needed in-kernel.
        pad = _LANES - rem
        pred_flat = jnp.pad(pred_flat, (0, pad), constant_values=1)
        tgt_flat = jnp.pad(tgt_flat, (0, pad), constant_values=1)

    r = pred_flat.size // _LANES                 # lane-dense rows (== cdiv(total, 128))
    pred_2d = pred_flat.reshape(r, _LANES)       # free reshape when total % 128 == 0
    tgt_2d = tgt_flat.reshape(r, _LANES)

    # Tile rows: multiple of 32 (safe sublane tiling for f32/bf16/int8), capped per chip.
    tm = max(32, min(tm_max, _round_up(_cdiv(r, num_shards), 32)))
    nb = _cdiv(r, tm)                            # row-blocks actually present in the array
    steps = _cdiv(nb, num_shards)                # row-blocks per shard

    def in_map(s, i):
        # Clamp so a fully out-of-range grid point just re-reads the last real block;
        # its contribution is masked to zero inside the kernel.
        return (jnp.minimum(s * steps + i, nb - 1), 0)

    kernel = functools.partial(_bce_kernel, valid_rows=r, steps=steps)

    cparams = dict(dimension_semantics=("parallel", "arbitrary"))
    if vmem_limit_bytes is not None:
        cparams["vmem_limit_bytes"] = int(vmem_limit_bytes)

    partials = pl.pallas_call(
        kernel,
        out_shape=jax.ShapeDtypeStruct((num_shards, 8, _LANES), jnp.float32),
        grid_spec=pltpu.PrefetchScalarGridSpec(
            num_scalar_prefetch=0,
            grid=(num_shards, steps),
            in_specs=[
                pl.BlockSpec((tm, _LANES), in_map),
                pl.BlockSpec((tm, _LANES), in_map),
            ],
            out_specs=pl.BlockSpec((1, 8, _LANES), lambda s, i: (s, 0, 0)),
        ),
        compiler_params=pltpu.CompilerParams(**cparams),
    )(pred_2d, tgt_2d)

    # Tiny final cross-lane reduce + sign + mean outside the kernel.
    return -jnp.sum(partials) / jnp.float32(total)


def bce_loss_reference(pred, target):
    """Pure-JAX reference matching torch.nn.BCELoss(reduction='mean')."""
    p = pred.astype(jnp.float32)
    t = target.astype(jnp.float32)
    log_p = jnp.maximum(jnp.log(p), -100.0)
    log_1mp = jnp.maximum(jnp.log(1.0 - p), -100.0)
    return jnp.mean(-(t * log_p + (1.0 - t) * log_1mp))


if __name__ == "__main__":
    key = jax.random.PRNGKey(0)
    ks = jax.random.split(key, 8)

    def make(shape, kp, kt, tgt_dtype=jnp.float32):
        pred = jax.nn.sigmoid(jax.random.normal(kp, shape, dtype=jnp.float32))
        tgt = jax.random.bernoulli(kt, 0.5, shape).astype(tgt_dtype)
        return pred, tgt

    def check(pred, tgt, **kw):
        loss = jax.block_until_ready(bce_loss(pred, tgt, **kw))
        ref = jax.block_until_ready(bce_loss_reference(pred, tgt))
        assert jnp.allclose(loss, ref, rtol=1e-5, atol=1e-6), (kw, loss, ref)

    # 1) Typical (batch, classes) shape from the module; lane-aligned (8*16 = 128 elems).
    p1, t1 = make((8, 16), ks[0], ks[1])
    check(p1, t1)                                    # per-chip defaults
    check(p1, t1, num_shards=2, tm_max=32)           # out-of-range-shard clamp path

    # 2) Both shards + ragged boundary tile + narrow bf16 target (6144 elems -> 48 rows).
    p2, t2 = make((2, 3, 16, 64), ks[2], ks[3], jnp.bfloat16)
    check(p2, t2, num_shards=2, tm_max=32)

    # 3) Multi-step accumulation along the "arbitrary" axis (8192 elems -> 64 rows).
    p3, t3 = make((8, 4, 16, 16), ks[4], ks[5])
    check(p3, t3, num_shards=1, tm_max=32)

    # 4) Lane-unaligned size -> loss-neutral pad path (105 elems).
    p4, t4 = make((3, 5, 7), ks[6], ks[7])
    check(p4, t4)

    # TODO(synk): evaluate()'s AP / accuracy metrics (sklearn/numpy on host) are not kernel
    # work; only the forward loss is implemented as a Pallas kernel.

    print("KERNEL_OK")
</pallas_src>

<mosaic_0001>
module attributes {stable_mosaic.version = 11 : i64} {
  func.func @_bce_kernel(%arg0: i32, %arg1: i32, %arg2: memref<32x128xf32, #tpu.memory_space<vmem>>, %arg3: memref<32x128xf32, #tpu.memory_space<vmem>>, %arg4: memref<1x8x128xf32, #tpu.memory_space<vmem>>) attributes {dimension_semantics = [#tpu.dimension_semantics<parallel>, #tpu.dimension_semantics<arbitrary>], iteration_bounds = array<i64: 1, 1>, scalar_prefetch = 0 : i64, scratch_operands = 0 : i64, tpu.core_type = #tpu.core_type<tc>, window_params = [{transform_indices = @transform_0, window_bounds = array<i64: 32, 128>}, {transform_indices = @transform_1, window_bounds = array<i64: 32, 128>}, {transform_indices = @transform_2, window_bounds = array<i64: 1, 8, 128>}]} {
    %c0_i32 = arith.constant 0 : i32
    %0 = arith.cmpi eq, %arg1, %c0_i32 : i32
    %1 = arith.extui %0 : i1 to i32
    %c0_i32_0 = arith.constant 0 : i32
    %2 = arith.cmpi ne, %1, %c0_i32_0 : i32
    scf.if %2 {
      %cst_12 = arith.constant 0.000000e+00 : f32
      %27 = vector.broadcast %cst_12 : f32 to vector<1x8x128xf32>
      %c0_13 = arith.constant 0 : index
      %c0_14 = arith.constant 0 : index
      %c0_15 = arith.constant 0 : index
      %28 = vector.load %arg4[%c0_13, %c0_14, %c0_15] : memref<1x8x128xf32, #tpu.memory_space<vmem>>, vector<1x8x128xf32>
      tpu.vector_store %arg4[%c0_13, %c0_14, %c0_15], %27 {strides = array<i32>} : memref<1x8x128xf32, #tpu.memory_space<vmem>>, vector<1x8x128xf32>,
    } else {
    }
    %c0 = arith.constant 0 : index
    %c0_1 = arith.constant 0 : index
    %3 = vector.load %arg2[%c0, %c0_1] : memref<32x128xf32, #tpu.memory_space<vmem>>, vector<32x128xf32>
    %c0_2 = arith.constant 0 : index
    %c0_3 = arith.constant 0 : index
    %4 = vector.load %arg3[%c0_2, %c0_3] : memref<32x128xf32, #tpu.memory_space<vmem>>, vector<32x128xf32>
    %5 = math.log %3 : vector<32x128xf32>
    %cst = arith.constant -1.000000e+02 : f32
    %6 = vector.broadcast %cst : f32 to vector<32x128xf32>
    %7 = arith.maximumf %5, %6 : vector<32x128xf32>
    %cst_4 = arith.constant 1.000000e+00 : f32
    %8 = vector.broadcast %cst_4 : f32 to vector<32x128xf32>
    %9 = arith.subf %8, %3 : vector<32x128xf32>
    %10 = math.log %9 : vector<32x128xf32>
    %cst_5 = arith.constant -1.000000e+02 : f32
    %11 = vector.broadcast %cst_5 : f32 to vector<32x128xf32>
    %12 = arith.maximumf %10, %11 : vector<32x128xf32>
    %13 = arith.subf %7, %12 : vector<32x128xf32>
    %14 = arith.mulf %4, %13 : vector<32x128xf32>
    %15 = arith.addf %12, %14 : vector<32x128xf32>
    %c1_i32 = arith.constant 1 : i32
    %16 = arith.muli %arg0, %c1_i32 : i32
    %17 = arith.addi %16, %arg1 : i32
    %c32_i32 = arith.constant 32 : i32
    %18 = arith.muli %17, %c32_i32 : i32
    %c32_i32_6 = arith.constant 32 : i32
    %19 = arith.addi %18, %c32_i32_6 : i32
    %c1_i32_7 = arith.constant 1 : i32
    %20 = arith.cmpi sle, %19, %c1_i32_7 : i32
    %21 = arith.extui %20 : i1 to i32
    %c0_i32_8 = arith.constant 0 : i32
    %22 = arith.cmpi ne, %21, %c0_i32_8 : i32
    scf.if %22 {
      %c0_12 = arith.constant 0 : index
      %c0_13 = arith.constant 0 : index
      %c0_14 = arith.constant 0 : index
      %27 = vector.load %arg4[%c0_12, %c0_13, %c0_14] : memref<1x8x128xf32, #tpu.memory_space<vmem>>, vector<1x8x128xf32>
      %28 = vector.shape_cast %15 : vector<32x128xf32> to vector<4x8x128xf32>
      %cst_15 = arith.constant dense<0.000000e+00> : vector<8x128xf32>
      %29 = vector.multi_reduction <add>, %28, %cst_15 [0] : vector<4x8x128xf32> to vector<8x128xf32>
      %30 = vector.shape_cast %29 : vector<8x128xf32> to vector<1x8x128xf32>
      %31 = arith.addf %27, %30 : vector<1x8x128xf32>
      %c0_16 = arith.constant 0 : index
      %c0_17 = arith.constant 0 : index
      %c0_18 = arith.constant 0 : index
      %32 = vector.load %arg4[%c0_16, %c0_17, %c0_18] : memref<1x8x128xf32, #tpu.memory_space<vmem>>, vector<1x8x128xf32>
      tpu.vector_store %arg4[%c0_16, %c0_17, %c0_18], %31 {strides = array<i32>} : memref<1x8x128xf32, #tpu.memory_space<vmem>>, vector<1x8x128xf32>,
    } else {
    }
    %c32_i32_9 = arith.constant 32 : i32
    %23 = arith.addi %18, %c32_i32_9 : i32
    %c1_i32_10 = arith.constant 1 : i32
    %24 = arith.cmpi sgt, %23, %c1_i32_10 : i32
    %25 = arith.extui %24 : i1 to i32
    %c0_i32_11 = arith.constant 0 : i32
    %26 = arith.cmpi ne, %25, %c0_i32_11 : i32
    scf.if %26 {
      %27 = tpu.iota {dimensions = array<i32: 0>} : vector<32x128xi32>
      %28 = vector.broadcast %18 : i32 to vector<32x128xi32>
      %29 = arith.addi %28, %27 : vector<32x128xi32>
      %c1_i32_12 = arith.constant 1 : i32
      %30 = vector.broadcast %c1_i32_12 : i32 to vector<32x128xi32>
      %31 = arith.cmpi slt, %29, %30 : vector<32x128xi32>
      %cst_13 = arith.constant 0.000000e+00 : f32
      %32 = vector.broadcast %cst_13 : f32 to vector<32x128xf32>
      %33 = arith.select %31, %15, %32 : vector<32x128xi1>, vector<32x128xf32>
      %c0_14 = arith.constant 0 : index
      %c0_15 = arith.constant 0 : index
      %c0_16 = arith.constant 0 : index
      %34 = vector.load %arg4[%c0_14, %c0_15, %c0_16] : memref<1x8x128xf32, #tpu.memory_space<vmem>>, vector<1x8x128xf32>
      %35 = vector.shape_cast %33 : vector<32x128xf32> to vector<4x8x128xf32>
      %cst_17 = arith.constant dense<0.000000e+00> : vector<8x128xf32>
      %36 = vector.multi_reduction <add>, %35, %cst_17 [0] : vector<4x8x128xf32> to vector<8x128xf32>
      %37 = vector.shape_cast %36 : vector<8x128xf32> to vector<1x8x128xf32>
      %38 = arith.addf %34, %37 : vector<1x8x128xf32>
      %c0_18 = arith.constant 0 : index
      %c0_19 = arith.constant 0 : index
      %c0_20 = arith.constant 0 : index
      %39 = vector.load %arg4[%c0_18, %c0_19, %c0_20] : memref<1x8x128xf32, #tpu.memory_space<vmem>>, vector<1x8x128xf32>
      tpu.vector_store %arg4[%c0_18, %c0_19, %c0_20], %38 {strides = array<i32>} : memref<1x8x128xf32, #tpu.memory_space<vmem>>, vector<1x8x128xf32>,
    } else {
    }
    return
  }
  func.func @transform_0(%arg0: i32, %arg1: i32) -> (i32, i32) {
    %c1_i32 = arith.constant 1 : i32
    %0 = arith.muli %arg0, %c1_i32 : i32
    %1 = arith.addi %0, %arg1 : i32
    %c0_i32 = arith.constant 0 : i32
    %2 = arith.minsi %1, %c0_i32 : i32
    %c0_i32_0 = arith.constant 0 : i32
    %c0_i32_1 = arith.constant 0 : i32
    return %2, %c0_i32_0 : i32, i32
  }
  func.func @transform_1(%arg0: i32, %arg1: i32) -> (i32, i32) {
    %c1_i32 = arith.constant 1 : i32
    %0 = arith.muli %arg0, %c1_i32 : i32
    %1 = arith.addi %0, %arg1 : i32
    %c0_i32 = arith.constant 0 : i32
    %2 = arith.minsi %1, %c0_i32 : i32
    %c0_i32_0 = arith.constant 0 : i32
    %c0_i32_1 = arith.constant 0 : i32
    return %2, %c0_i32_0 : i32, i32
  }
  func.func @transform_2(%arg0: i32, %arg1: i32) -> (i32, i32, i32) {
    %c0_i32 = arith.constant 0 : i32
    %c0_i32_0 = arith.constant 0 : i32
    %c0_i32_1 = arith.constant 0 : i32
    return %arg0, %c0_i32, %c0_i32_0 : i32, i32, i32
  }
}

</mosaic_0001>

<llo_original>
// kernel: tpu_custom_call.1
$region0: #{tpu_custom_call.1}
  #allocation0 [shape = 'u32[]', space=smem, size = 0x4, offset = 0x4, fixed_abs, tag = 'smem constant byte address 0x4 - core index']
  #allocation1 [shape = 'u32[144,128]{1,0:T(1,128)}', space=vmem, size = 0x12000, scoped, tag = 'internal scratch']
  %s0 = inlined_call_operand.hbm [shape: f32[1,128], index: 0, kind: input, shape index: {}]
  %s1 = inlined_call_operand.vmem [shape: f32[1,128], index: 1, kind: input, shape index: {}]
  %s2 = inlined_call_operand.hbm [shape: f32[1,8,128], index: 2, kind: output, shape index: {}]
  %s3 = sld [smem:[#allocation0]]
  $region34: #{tpu_custom_call.1} parent=0
    _
  %s5 = ssub.s32 1, %s3
  %s6 = scalar_select 0, %s5, %s3
  $region1: #{tpu_custom_call.1} parent=0
    #allocation2 [shape = 'u8[16384]{0}', space=vmem, size = 0x4000, scoped, tag = 'input window, operand 0, single buffered']
    #allocation3 [shape = 's32[1]{0}', space=sflag, size = 0x4, scoped, tag = 'scoped memory for tpu_custom_call.1']
    #allocation4 [shape = 's32[1]{0}', space=sflag, size = 0x4, scoped, tag = 'scoped memory for tpu_custom_call.1']
    #allocation5 [shape = 'u8[4096]{0}', space=vmem, size = 0x1000, scoped, tag = 'output window, operand 0, single buffered']
    %7 = vsyncpa [#allocation3], 0
    %8 = vsyncpa [#allocation4], 0
    // Predicated region
    $region2: #{tpu_custom_call.1} parent=1 // pred_check
      _
    $region3: #{tpu_custom_call.1} parent=1 // pred_check_branch
      %10 = sbr.rel (0) target = $region5
    $region4: #{tpu_custom_call.1} parent=1 // pred_region
      %s11 = sadd.s32 0, 0
      %p12 = scmp.lt.s32.totalorder %s11, 0
      %s13 = scalar_select %p12, %s11, 0
      %s14 = smul.u32 32, %s13
      %s15 = ssub.s32 1, %s14
      %s16 = smul.u32 16, %s15
      %s18 = ssub.s32 512, %s16
      %19 = vsyncadd [#allocation3], %s18
      %p20 = scmp.ne.s32.totalorder 0, %s16
      %s21 = smul.addr %s14, 16
      %s22 = scalar_lea.hbm %s0, %s21
      %s23 = sshll.u32 [#allocation2], 4
      %s24 = int_to_ptr.vmem [resolvable:$true] %s23
      %s25 = sshll.u32 %s15, 4
      %29 = dma.hbm_to_vmem [thread:$0]  (%p20), %s22, %s25, %s24, [#allocation3], 16, 16, 1
    $region5: #{tpu_custom_call.1} parent=1 // pred_fallthru
      _
    // Predicated region
    $region6: #{tpu_custom_call.1} parent=1 // pred_check
      _
    $region7: #{tpu_custom_call.1} parent=1 // pred_check_branch
      %31 = sbr.rel (0) target = $region9
    $region8: #{tpu_custom_call.1} parent=1 // pred_region
      %s32 = sadd.s32 0, 0
      %p33 = scmp.lt.s32.totalorder %s32, 0
      %s34 = scalar_select %p33, %s32, 0
      %s35 = smul.u32 32, %s34
      %s36 = ssub.s32 1, %s35
      %s37 = smul.u32 16, %s36
      %p38 = scmp.lt.s32.totalorder %s35, 0
      %s39 = scalar_select %p38, %s35, 0
      %s40 = scalar_lea.vmem %s1, %s39
      %s41 = sadd.s32 0, 0
      %p42 = scmp.lt.s32.totalorder %s41, 0
      %s43 = scalar_select %p42, %s41, 0
      %s44 = smul.u32 32, %s43
      %s45 = ssub.s32 1, %s44
      %s46 = smul.u32 16, %s45
    $region9: #{tpu_custom_call.1} parent=1 // pred_fallthru
      _
    // Predicated region
    $region10: #{tpu_custom_call.1} parent=1 // pred_check
      _
    $region11: #{tpu_custom_call.1} parent=1 // pred_check_branch
      %48 = sbr.rel (0) target = $region13
    $region12: #{tpu_custom_call.1} parent=1 // pred_region
      %49 = dma.done [#allocation3], 512
    $region13: #{tpu_custom_call.1} parent=1 // pred_fallthru
      _
    %s50 = sadd.s32 0, 0
    %p51 = scmp.lt.s32.totalorder %s50, 0
    %s52 = scalar_select %p51, %s50, 0
    %s53 = smul.u32 32, %s52
    %s54 = ssub.s32 1, %s53
    %s55 = smul.u32 16, %s54
    %p56 = scmp.lt.s32.totalorder %s53, 0
    %s57 = scalar_select %p56, %s53, 0
    %s58 = scalar_lea.vmem %s1, %s57
    %s59 = sadd.s32 0, 0
    %p60 = scmp.lt.s32.totalorder %s59, 0
    %s61 = scalar_select %p60, %s59, 0
    %s62 = smul.u32 32, %s61
    %s63 = ssub.s32 1, %s62
    %s64 = smul.u32 16, %s63
    %s65 = sadd.s32 0, 0
    %p66 = scmp.lt.s32.totalorder %s65, 0
    %s67 = scalar_select %p66, %s65, 0
    %s68 = smul.u32 32, %s67
    %s69 = ssub.s32 1, %s68
    %s70 = smul.u32 16, %s69
    %p71 = scmp.lt.s32.totalorder %s68, 0
    %s72 = scalar_select %p71, %s68, 0
    %s73 = scalar_lea.vmem %s1, %s72
    %s74 = sadd.s32 0, 0
    %p75 = scmp.lt.s32.totalorder %s74, 0
    %s76 = scalar_select %p75, %s74, 0
    %s77 = smul.u32 32, %s76
    %s78 = ssub.s32 1, %s77
    %s79 = smul.u32 16, %s78
    %p80 = scmp.eq.s32.totalorder 0, 0
    // Predicated region
    $region14: #{tpu_custom_call.1} parent=1 // pred_check
      %p81 = pneg %p80
    $region15: #{tpu_custom_call.1} parent=1 // pred_check_branch
      %83 = sbr.rel (%p81) target = $region17
    $region16: #{tpu_custom_call.1} parent=1 // pred_region
      %84 = vst [vmem:[#allocation5] sm:$0xff] 0.0
    $region17: #{tpu_custom_call.1} parent=1 // pred_fallthru
      _
    %v85 = vld [vmem:[#allocation2] sm:$0xff]
    %v86 = vld [vmem:[#allocation2 + $0x8] sm:$0xff]
    %v87 = vld [vmem:[#allocation2 + $0x10] sm:$0xff]
    %v88 = vld [vmem:[#allocation2 + $0x18] sm:$0xff]
    %v89 = vld [vmem:[%s73] sm:$0xff]
    %v90 = vld [vmem:[%s73 + $0x8] sm:$0xff]
    %v91 = vld [vmem:[%s73 + $0x10] sm:$0xff]
    %v92 = vld [vmem:[%s73 + $0x18] sm:$0xff]
    %v93 = vlog2.pop %v85
    %v94 = vmul.f32 %v93, 0.6931472
    %v95 = vlog2.pop %v86
    %v96 = vmul.f32 %v95, 0.6931472
    %v97 = vlog2.pop %v87
    %v98 = vmul.f32 %v97, 0.6931472
    %v99 = vlog2.pop %v88
    %v100 = vmul.f32 %v99, 0.6931472
    %v101 = vmax.f32 %v94, -100.0
    %v102 = vmax.f32 %v96, -100.0
    %v103 = vmax.f32 %v98, -100.0
    %v104 = vmax.f32 %v100, -100.0
    %v105 = vsub.f32 1.0, %v85
    %v106 = vsub.f32 1.0, %v86
    %v107 = vsub.f32 1.0, %v87
    %v108 = vsub.f32 1.0, %v88
    %v109 = vlog2.pop %v105
    %v110 = vmul.f32 %v109, 0.6931472
    %v111 = vlog2.pop %v106
    %v112 = vmul.f32 %v111, 0.6931472
    %v113 = vlog2.pop %v107
    %v114 = vmul.f32 %v113, 0.6931472
    %v115 = vlog2.pop %v108
    %v116 = vmul.f32 %v115, 0.6931472
    %v117 = vmax.f32 %v110, -100.0
    %v118 = vmax.f32 %v112, -100.0
    %v119 = vmax.f32 %v114, -100.0
    %v120 = vmax.f32 %v116, -100.0
    %v121 = vsub.f32 %v101, %v117
    %v122 = vsub.f32 %v102, %v118
    %v123 = vsub.f32 %v103, %v119
    %v124 = vsub.f32 %v104, %v120
    %v125 = vmul.f32 %v89, %v121
    %v126 = vmul.f32 %v90, %v122
    %v127 = vmul.f32 %v91, %v123
    %v128 = vmul.f32 %v92, %v124
    %v129 = vadd.f32 %v117, %v125
    %v130 = vadd.f32 %v118, %v126
    %v131 = vadd.f32 %v119, %v127
    %v132 = vadd.f32 %v120, %v128
    %s133 = sadd.s32 0, 0
    %s134 = smul.u32 %s133, 32
    %s135 = sadd.s32 %s134, 32
    %p136 = scmp.le.s32.totalorder %s135, 1
    // Predicated region
    $region18: #{tpu_custom_call.1} parent=1 // pred_check
      %p137 = pneg %p136
    $region19: #{tpu_custom_call.1} parent=1 // pred_check_branch
      %139 = sbr.rel (%p137) target = $region21
    $region20: #{tpu_custom_call.1} parent=1 // pred_region
      %v140 = vld [vmem:[#allocation5] sm:$0xff]
      %v141 = vadd.f32 %v129, %v130
      %v142 = vadd.f32 %v141, %v131
      %v143 = vadd.f32 %v142, %v132
      %v144 = vadd.f32 %v140, %v143
      %145 = vst [vmem:[#allocation5] sm:$0xff] %v144
    $region21: #{tpu_custom_call.1} parent=1 // pred_fallthru
      _
    %p146 = scmp.gt.s32.totalorder %s135, 1
    // Predicated region
    $region22: #{tpu_custom_call.1} parent=1 // pred_check
      %p147 = pneg %p146
    $region23: #{tpu_custom_call.1} parent=1 // pred_check_branch
      %149 = sbr.rel (%p147) target = $region25
    $region24: #{tpu_custom_call.1} parent=1 // pred_region
      %v150 = vlaneseq
      %v151 = vshrl.u32 %v150, 7
      %v152 = vadd.s32 %v151, 8
      %v153 = vadd.s32 %v151, 16
      %v154 = vadd.s32 %v151, 24
      %v155 = vstv %s134
      %v156 = vadd.s32 %v155, %v151
      %v157 = vadd.s32 %v155, %v152
      %v158 = vadd.s32 %v155, %v153
      %v159 = vadd.s32 %v155, %v154
      %vm160 = vcmp.lt.s32.totalorder %v156, 1
      %vm161 = vcmp.lt.s32.totalorder %v157, 1
      %vm162 = vcmp.lt.s32.totalorder %v158, 1
      %vm163 = vcmp.lt.s32.totalorder %v159, 1
      %v164 = vsel %vm160, %v129, 0.0
      %v165 = vsel %vm161, %v130, 0.0
      %v166 = vsel %vm162, %v131, 0.0
      %v167 = vsel %vm163, %v132, 0.0
      %v168 = vld [vmem:[#allocation5] sm:$0xff]
      %v169 = vadd.f32 %v164, %v165
      %v170 = vadd.f32 %v169, %v166
      %v171 = vadd.f32 %v170, %v167
      %v172 = vadd.f32 %v168, %v171
      %173 = vst [vmem:[#allocation5] sm:$0xff] %v172
    $region25: #{tpu_custom_call.1} parent=1 // pred_fallthru
      _
    // Predicated region
    $region26: #{tpu_custom_call.1} parent=1 // pred_check
      _
    $region27: #{tpu_custom_call.1} parent=1 // pred_check_branch
      %175 = sbr.rel (0) target = $region29
    $region28: #{tpu_custom_call.1} parent=1 // pred_region
      %s177 = ssub.s32 128, 128
      %178 = vsyncadd [#allocation4], %s177
      %s180 = sshll.u32 [#allocation5], 4
      %s181 = int_to_ptr.vmem [resolvable:$true] %s180
      %183 = dma.vmem_to_hbm [thread:$0]  %s181, 128, %s2, [#allocation4]
    $region29: #{tpu_custom_call.1} parent=1 // pred_fallthru
      _
    // Predicated region
    $region30: #{tpu_custom_call.1} parent=1 // pred_check
      _
    $region31: #{tpu_custom_call.1} parent=1 // pred_check_branch
      %185 = sbr.rel (0) target = $region33
    $region32: #{tpu_custom_call.1} parent=1 // pred_region
      %186 = dma.done [#allocation4], 128
    $region33: #{tpu_custom_call.1} parent=1 // pred_fallthru
      _
    %187 = vsyncpa [#allocation3], 1
    %188 = vsyncpa [#allocation4], 1

</llo_original>
